<compile_context>
chip_gen: v7x
topology: tpu7x:2x2x1
jax: 0.10.0
libtpu: 0.0.40
codegen_flags: <defaults>
</compile_context>

<pallas_src>
import functools

import jax
import jax.numpy as jnp
from jax.experimental import pallas as pl
from jax.experimental.pallas import tpu as pltpu

# Hyper-parameters from the module __init__ defaults.
LAMBD_CENTROID = 0.04
LAMBD_CLOSE = 0.01
WEIGHT_FACTOR = 10.0          # only used by the torch module's dead `weighted_mse_loss`
WEIGHT_FACTOR_UPPER = 10.0
WEIGHT_FACTOR_LOWER = 10.0


def _loss_kernel(tmean_ref, yp_ref, yt_ref, out_ref, acc_ref, carry_ref, *,
                 c_base, c_up, c_lo, c_centroid, lambd_close):
    i = pl.program_id(1)                       # inner (sequential) tile axis

    yp = yp_ref[...].astype(jnp.float32)
    yt = yt_ref[...].astype(jnp.float32)
    tn, d = yp.shape

    row0 = yp[0:1, :]
    last_row = yp[tn - 1:tn, :]

    @pl.when(i == 0)
    def _init():
        acc_ref[...] = jnp.zeros_like(acc_ref)
        # Seed the carry with this tile's own first row so the cross-tile
        # boundary term is exactly zero for the first tile of each half.
        carry_ref[...] = row0

    diff = yp - yt
    sq = diff * diff

    # Fused, pre-scaled MSE weight: mse + weighted_upper + weighted_lower
    # collapsed into one select chain ((yt>=20) and (yt<18) are mutually
    # exclusive); 1/(N*D) is folded into the compile-time constants.
    wsel = jnp.where(yt >= 20.0, c_up, jnp.where(yt < 18.0, c_lo, c_base))

    t_mean = tmean_ref[0, 0]

    # Neighbour differences via an XLU sublane rotation (free-ish slot).
    # The per-tile sum of |prev - yp| is direction-invariant: it covers every
    # within-tile adjacent pair plus the wrap pair |yp[tn-1]-yp[0]|.
    prev = pltpu.roll(yp, shift=1, axis=0)

    # Single fused elementwise term covering every contribution.
    t = (wsel * sq
         + c_centroid * jnp.abs(yp - t_mean)
         + lambd_close * jnp.abs(prev - yp))

    # (TN, D) -> (8, D) partial with pure VALU adds (layout-preserving reshape:
    # the last two dims stay (8, D), so the (8,128) tiles are untouched).
    partial = t.reshape(tn // 8, 8, d).sum(axis=0)

    # Neighbour-penalty corrections, folded into row 0 of the partial:
    #   - remove the spurious wrap pair |yp[tn-1] - yp[0]|
    #   + add the cross-tile pair |carry - yp[0]|  (carry = prev tile's last row)
    carry = carry_ref[...]
    corr = lambd_close * (jnp.abs(carry - row0) - jnp.abs(last_row - row0))
    row_idx = jax.lax.broadcasted_iota(jnp.int32, (8, 1), 0)
    partial = partial + jnp.where(row_idx == 0, corr, 0.0)

    # Single tiny accumulate into the persistent (8, D) scratch.
    acc_ref[...] += partial
    carry_ref[...] = last_row

    @pl.when(i == pl.num_programs(1) - 1)
    def _finalize():
        total = jnp.sum(acc_ref[...])          # the only cross-lane reduction
        out_ref[...] = jnp.broadcast_to(total, out_ref.shape)


def _vmem_limit_bytes():
    """Per-generation VMEM budget: ~3/4 of physical (96 MiB on 128-MiB v5e/v6e,
    48 MiB on v7x's 64-MiB-per-TC parts).  Falls back to the v7x-safe value."""
    phys = 64 * 1024 * 1024
    try:
        info = pltpu.get_tpu_info()
        cap = getattr(info, "vmem_capacity_bytes", None)
        if cap:
            phys = int(cap)
    except Exception:
        pass
    return int(min(phys * 3 // 4, 96 * 1024 * 1024))


def _pick_block_rows(rows_per_half, d, elem_bytes, vmem_limit_bytes):
    """Largest multiple-of-8 row tile dividing rows_per_half that fits VMEM:
    2 inputs x 2 pipeline buffers at the input dtype, plus ~6 simultaneously
    live f32 (TN, D) temporaries inside the body, capped at ~4 MiB/input tile."""
    bytes_per_row = d * (4 * elem_bytes + 6 * 4)
    budget_rows = int(0.7 * vmem_limit_bytes) // max(bytes_per_row, 1)
    cap_rows = (4 * 1024 * 1024) // max(d * elem_bytes, 1)
    max_rows = min(budget_rows, cap_rows, rows_per_half)
    max_rows = max(8, (max_rows // 8) * 8)
    for tn in range(max_rows, 7, -8):
        if rows_per_half % tn == 0:
            return tn
    return 8   # always divides (rows_per_half is a multiple of 8)


def loss_uniform_spread_l2(y_pred, y_true,
                           lambd_centroid=LAMBD_CENTROID,
                           lambd_close=LAMBD_CLOSE,
                           weight_factor_upper=WEIGHT_FACTOR_UPPER,
                           weight_factor_lower=WEIGHT_FACTOR_LOWER,
                           block_rows=None):
    assert y_pred.shape == y_true.shape and y_pred.ndim == 2
    n, d = y_pred.shape
    inv_n = 1.0 / float(n * d)

    # Pad rows to a multiple of 16 so the array splits into two halves (one per
    # TensorCore on megacore parts) whose row counts are multiples of 8.
    # Padded rows are zeros; their contributions are removed below.
    n_pad = ((n + 15) // 16) * 16
    pad = n_pad - n
    if pad:
        yp_p = jnp.concatenate([y_pred, jnp.zeros((pad, d), y_pred.dtype)], axis=0)
        yt_p = jnp.concatenate([y_true, jnp.zeros((pad, d), y_true.dtype)], axis=0)
    else:
        yp_p, yt_p = y_pred, y_true

    half_rows = n_pad // 2
    vmem_limit = _vmem_limit_bytes()
    elem_bytes = jnp.dtype(y_pred.dtype).itemsize
    if (block_rows is None or block_rows <= 0 or block_rows % 8 != 0
            or half_rows % block_rows != 0):
        block_rows = _pick_block_rows(half_rows, d, elem_bytes, vmem_limit)
    tiles_per_half = half_rows // block_rows

    # mean(y_true) over the real rows, computed once by XLA, handed to the
    # kernel as an SMEM scalar so the kernel stays single-pass over both arrays.
    t_mean = jnp.mean(y_true.astype(jnp.float32)).reshape(1, 1)

    # Pre-scaled constants (1/(N*D) and the "+1" mse weight folded in).
    c_base = 3.0 * inv_n
    c_up = (2.0 + float(weight_factor_upper)) * inv_n
    c_lo = (2.0 + float(weight_factor_lower)) * inv_n
    c_centroid = float(lambd_centroid) * inv_n

    kernel = functools.partial(
        _loss_kernel, c_base=c_base, c_up=c_up, c_lo=c_lo,
        c_centroid=c_centroid, lambd_close=float(lambd_close))

    partials = pl.pallas_call(
        kernel,
        grid=(2, tiles_per_half),
        in_specs=[
            pl.BlockSpec(memory_space=pltpu.SMEM),                  # mean(y_true), (1,1)
            pl.BlockSpec((block_rows, d), lambda h, i: (h * tiles_per_half + i, 0)),
            pl.BlockSpec((block_rows, d), lambda h, i: (h * tiles_per_half + i, 0)),
        ],
        out_specs=pl.BlockSpec((1, 8, 128), lambda h, i: (h, 0, 0)),
        out_shape=jax.ShapeDtypeStruct((2, 8, 128), jnp.float32),   # per-half partials
        scratch_shapes=[
            pltpu.VMEM((8, d), jnp.float32),    # shrunken partial-sum accumulator
            pltpu.VMEM((1, d), jnp.float32),    # last row of previous tile (carry)
        ],
        compiler_params=pltpu.CompilerParams(
            dimension_semantics=("parallel", "arbitrary"),
            vmem_limit_bytes=vmem_limit,
        ),
    )(t_mean, yp_p, yt_p)

    loss = partials[0, 0, 0] + partials[1, 0, 0]

    # Cross-half neighbour pair that neither half's pass sees.
    a = yp_p[half_rows - 1].astype(jnp.float32)
    b = yp_p[half_rows].astype(jnp.float32)
    loss = loss + float(lambd_close) * jnp.sum(jnp.abs(a - b))

    if pad:
        # Padded zero rows contributed |0 - mean(y_true)| to the centroid term
        # and one spurious neighbour pair |y_pred[n-1] - 0|; remove both.
        loss = loss - float(lambd_centroid) * (float(pad) / float(n)) * jnp.abs(t_mean[0, 0])
        loss = loss - float(lambd_close) * jnp.sum(
            jnp.abs(y_pred[n - 1].astype(jnp.float32)))
    return loss


def _reference_loss(y_pred, y_true,
                    lambd_centroid=LAMBD_CENTROID,
                    lambd_close=LAMBD_CLOSE,
                    weight_factor_upper=WEIGHT_FACTOR_UPPER,
                    weight_factor_lower=WEIGHT_FACTOR_LOWER):
    """Pure-JAX mirror of the PyTorch forward (for verification)."""
    yp = y_pred.astype(jnp.float32)
    yt = y_true.astype(jnp.float32)
    mse = jnp.mean((yt - yp) ** 2)
    penalty_close = lambd_close * jnp.sum(jnp.abs(yp[:-1] - yp[1:]))
    targets_mean = jnp.mean(yt)
    penalty_centroid = lambd_centroid * jnp.mean(jnp.abs(yp - targets_mean))
    upper = jnp.mean(jnp.where(yt >= 20.0, weight_factor_upper, 1.0) * (yp - yt) ** 2)
    lower = jnp.mean(jnp.where(yt < 18.0, weight_factor_lower, 1.0) * (yp - yt) ** 2)
    return mse + penalty_centroid + penalty_close + lower + upper


if __name__ == "__main__":
    key = jax.random.PRNGKey(0)
    k1, k2, k3, k4 = jax.random.split(key, 4)

    # Case 1: rows already a multiple of 16 (no padding path).
    N, D = 64, 128
    y_true = jax.random.uniform(k1, (N, D), jnp.float32, minval=15.0, maxval=23.0)
    y_pred = y_true + 0.5 * jax.random.normal(k2, (N, D), jnp.float32)
    ref = jax.block_until_ready(_reference_loss(y_pred, y_true))
    loss_auto = jax.block_until_ready(loss_uniform_spread_l2(y_pred, y_true))
    # Forced small tiles: exercises the multi-tile carry + accumulator paths.
    loss_tiled = jax.block_until_ready(
        loss_uniform_spread_l2(y_pred, y_true, block_rows=8))
    assert jnp.allclose(loss_auto, ref, rtol=1e-5, atol=1e-5), (loss_auto, ref)
    assert jnp.allclose(loss_tiled, ref, rtol=1e-5, atol=1e-5), (loss_tiled, ref)

    # Case 2: rows not a multiple of 16 (exercises the zero-padding fixups).
    N2, D2 = 44, 128
    y_true2 = jax.random.uniform(k3, (N2, D2), jnp.float32, minval=15.0, maxval=23.0)
    y_pred2 = y_true2 + 0.5 * jax.random.normal(k4, (N2, D2), jnp.float32)
    ref2 = jax.block_until_ready(_reference_loss(y_pred2, y_true2))
    loss2 = jax.block_until_ready(loss_uniform_spread_l2(y_pred2, y_true2))
    assert jnp.allclose(loss2, ref2, rtol=1e-5, atol=1e-5), (loss2, ref2)

    print("KERNEL_OK")
</pallas_src>

<mosaic_0001>
module attributes {stable_mosaic.version = 11 : i64} {
  func.func @_loss_kernel(%arg0: i32, %arg1: i32, %arg2: memref<1x1xf32, #tpu.memory_space<smem>>, %arg3: memref<32x128xf32, #tpu.memory_space<vmem>>, %arg4: memref<32x128xf32, #tpu.memory_space<vmem>>, %arg5: memref<1x8x128xf32, #tpu.memory_space<vmem>>, %arg6: memref<8x128xf32, #tpu.memory_space<vmem>>, %arg7: memref<1x128xf32, #tpu.memory_space<vmem>>) attributes {dimension_semantics = [#tpu.dimension_semantics<parallel>, #tpu.dimension_semantics<arbitrary>], iteration_bounds = array<i64: 2, 1>, scalar_prefetch = 0 : i64, scratch_operands = 2 : i64, tpu.core_type = #tpu.core_type<tc>, window_params = [{transform_indices = @transform_0, window_bounds = array<i64: 1, 1>}, {transform_indices = @transform_1, window_bounds = array<i64: 32, 128>}, {transform_indices = @transform_2, window_bounds = array<i64: 32, 128>}, {transform_indices = @transform_3, window_bounds = array<i64: 1, 8, 128>}]} {
    %c0 = arith.constant 0 : index
    %c0_0 = arith.constant 0 : index
    %0 = vector.load %arg3[%c0, %c0_0] : memref<32x128xf32, #tpu.memory_space<vmem>>, vector<32x128xf32>
    %c0_1 = arith.constant 0 : index
    %c0_2 = arith.constant 0 : index
    %1 = vector.load %arg4[%c0_1, %c0_2] : memref<32x128xf32, #tpu.memory_space<vmem>>, vector<32x128xf32>
    %2 = vector.extract_strided_slice %0 {offsets = [0, 0], sizes = [1, 128], strides = [1, 1]} : vector<32x128xf32> to vector<1x128xf32>
    %3 = vector.extract_strided_slice %0 {offsets = [31, 0], sizes = [1, 128], strides = [1, 1]} : vector<32x128xf32> to vector<1x128xf32>
    %c0_i32 = arith.constant 0 : i32
    %4 = arith.cmpi eq, %arg1, %c0_i32 : i32
    %5 = arith.extui %4 : i1 to i32
    %c0_i32_3 = arith.constant 0 : i32
    %6 = arith.cmpi ne, %5, %c0_i32_3 : i32
    scf.if %6 {
      %cst_26 = arith.constant 0.000000e+00 : f32
      %59 = vector.broadcast %cst_26 : f32 to vector<8x128xf32>
      %c0_27 = arith.constant 0 : index
      %c0_28 = arith.constant 0 : index
      %60 = vector.load %arg6[%c0_27, %c0_28] : memref<8x128xf32, #tpu.memory_space<vmem>>, vector<8x128xf32>
      tpu.vector_store %arg6[%c0_27, %c0_28], %59 {strides = array<i32>} : memref<8x128xf32, #tpu.memory_space<vmem>>, vector<8x128xf32>,
      %c0_29 = arith.constant 0 : index
      %c0_30 = arith.constant 0 : index
      %61 = vector.load %arg7[%c0_29, %c0_30] : memref<1x128xf32, #tpu.memory_space<vmem>>, vector<1x128xf32>
      tpu.vector_store %arg7[%c0_29, %c0_30], %2 {strides = array<i32>} : memref<1x128xf32, #tpu.memory_space<vmem>>, vector<1x128xf32>,
    } else {
    }
    %7 = arith.subf %0, %1 : vector<32x128xf32>
    %8 = arith.mulf %7, %7 : vector<32x128xf32>
    %cst = arith.constant 2.000000e+01 : f32
    %9 = vector.broadcast %cst : f32 to vector<32x128xf32>
    %10 = arith.cmpf oge, %1, %9 : vector<32x128xf32>
    %cst_4 = arith.constant 1.800000e+01 : f32
    %11 = vector.broadcast %cst_4 : f32 to vector<32x128xf32>
    %12 = arith.cmpf olt, %1, %11 : vector<32x128xf32>
    %cst_5 = arith.constant 0.00146484375 : f32
    %cst_6 = arith.constant 3.66210938E-4 : f32
    %13 = vector.broadcast %cst_5 : f32 to vector<32x128xf32>
    %14 = vector.broadcast %cst_6 : f32 to vector<32x128xf32>
    %15 = arith.select %12, %13, %14 : vector<32x128xi1>, vector<32x128xf32>
    %cst_7 = arith.constant 0.00146484375 : f32
    %16 = vector.broadcast %cst_7 : f32 to vector<32x128xf32>
    %17 = arith.select %10, %16, %15 : vector<32x128xi1>, vector<32x128xf32>
    %c0_8 = arith.constant 0 : index
    %c0_9 = arith.constant 0 : index
    %18 = memref.load %arg2[%c0_8, %c0_9] : memref<1x1xf32, #tpu.memory_space<smem>>
    %c1_i32 = arith.constant 1 : i32
    %19 = tpu.dynamic_rotate %0 by %c1_i32 dim 0 : vector<32x128xf32>, i32 -> vector<32x128xf32>
    %20 = arith.mulf %17, %8 : vector<32x128xf32>
    %21 = vector.broadcast %18 : f32 to vector<32x128xf32>
    %22 = arith.subf %0, %21 : vector<32x128xf32>
    %23 = math.absf %22 : vector<32x128xf32>
    %cst_10 = arith.constant 4.88281239E-6 : f32
    %24 = vector.broadcast %cst_10 : f32 to vector<32x128xf32>
    %25 = arith.mulf %24, %23 : vector<32x128xf32>
    %26 = arith.addf %20, %25 : vector<32x128xf32>
    %27 = arith.subf %19, %0 : vector<32x128xf32>
    %28 = math.absf %27 : vector<32x128xf32>
    %cst_11 = arith.constant 0.00999999977 : f32
    %29 = vector.broadcast %cst_11 : f32 to vector<32x128xf32>
    %30 = arith.mulf %29, %28 : vector<32x128xf32>
    %31 = arith.addf %26, %30 : vector<32x128xf32>
    %32 = vector.shape_cast %31 : vector<32x128xf32> to vector<4x8x128xf32>
    %cst_12 = arith.constant dense<0.000000e+00> : vector<8x128xf32>
    %33 = vector.multi_reduction <add>, %32, %cst_12 [0] : vector<4x8x128xf32> to vector<8x128xf32>
    %c0_13 = arith.constant 0 : index
    %c0_14 = arith.constant 0 : index
    %34 = vector.load %arg7[%c0_13, %c0_14] : memref<1x128xf32, #tpu.memory_space<vmem>>, vector<1x128xf32>
    %35 = arith.subf %34, %2 : vector<1x128xf32>
    %36 = math.absf %35 : vector<1x128xf32>
    %37 = arith.subf %3, %2 : vector<1x128xf32>
    %38 = math.absf %37 : vector<1x128xf32>
    %39 = arith.subf %36, %38 : vector<1x128xf32>
    %cst_15 = arith.constant 0.00999999977 : f32
    %40 = vector.broadcast %cst_15 : f32 to vector<1x128xf32>
    %41 = arith.mulf %40, %39 : vector<1x128xf32>
    %42 = tpu.iota {dimensions = array<i32: 0>} : vector<8x1xi32>
    %c0_i32_16 = arith.constant 0 : i32
    %43 = vector.broadcast %c0_i32_16 : i32 to vector<8x1xi32>
    %44 = arith.cmpi eq, %42, %43 : vector<8x1xi32>
    %cst_17 = arith.constant 0.000000e+00 : f32
    %45 = vector.shape_cast %44 : vector<8x1xi1> to vector<8x1xi1>
    %46 = vector.broadcast %45 : vector<8x1xi1> to vector<8x128xi1>
    %47 = vector.shape_cast %41 : vector<1x128xf32> to vector<1x128xf32>
    %48 = vector.broadcast %47 : vector<1x128xf32> to vector<8x128xf32>
    %49 = vector.broadcast %cst_17 : f32 to vector<8x128xf32>
    %50 = arith.select %46, %48, %49 : vector<8x128xi1>, vector<8x128xf32>
    %51 = arith.addf %33, %50 : vector<8x128xf32>
    %c0_18 = arith.constant 0 : index
    %c0_19 = arith.constant 0 : index
    %52 = vector.load %arg6[%c0_18, %c0_19] : memref<8x128xf32, #tpu.memory_space<vmem>>, vector<8x128xf32>
    %53 = arith.addf %52, %51 : vector<8x128xf32>
    %c0_20 = arith.constant 0 : index
    %c0_21 = arith.constant 0 : index
    %54 = vector.load %arg6[%c0_20, %c0_21] : memref<8x128xf32, #tpu.memory_space<vmem>>, vector<8x128xf32>
    tpu.vector_store %arg6[%c0_20, %c0_21], %53 {strides = array<i32>} : memref<8x128xf32, #tpu.memory_space<vmem>>, vector<8x128xf32>,
    %c0_22 = arith.constant 0 : index
    %c0_23 = arith.constant 0 : index
    %55 = vector.load %arg7[%c0_22, %c0_23] : memref<1x128xf32, #tpu.memory_space<vmem>>, vector<1x128xf32>
    tpu.vector_store %arg7[%c0_22, %c0_23], %3 {strides = array<i32>} : memref<1x128xf32, #tpu.memory_space<vmem>>, vector<1x128xf32>,
    %c0_i32_24 = arith.constant 0 : i32
    %56 = arith.cmpi eq, %arg1, %c0_i32_24 : i32
    %57 = arith.extui %56 : i1 to i32
    %c0_i32_25 = arith.constant 0 : i32
    %58 = arith.cmpi ne, %57, %c0_i32_25 : i32
    scf.if %58 {
      %c0_26 = arith.constant 0 : index
      %c0_27 = arith.constant 0 : index
      %59 = vector.load %arg6[%c0_26, %c0_27] : memref<8x128xf32, #tpu.memory_space<vmem>>, vector<8x128xf32>
      %60 = vector.shape_cast %59 : vector<8x128xf32> to vector<1x8x128xf32>
      %cst_28 = arith.constant dense<0.000000e+00> : vector<1xf32>
      %61 = vector.multi_reduction <add>, %60, %cst_28 [1, 2] : vector<1x8x128xf32> to vector<1xf32>
      %62 = vector.shape_cast %61 : vector<1xf32> to vector<1x1x1xf32>
      %63 = vector.extract %62[0, 0, 0] : f32 from vector<1x1x1xf32>
      %64 = vector.broadcast %63 : f32 to vector<1x8x128xf32>
      %c0_29 = arith.constant 0 : index
      %c0_30 = arith.constant 0 : index
      %c0_31 = arith.constant 0 : index
      %65 = vector.load %arg5[%c0_29, %c0_30, %c0_31] : memref<1x8x128xf32, #tpu.memory_space<vmem>>, vector<1x8x128xf32>
      tpu.vector_store %arg5[%c0_29, %c0_30, %c0_31], %64 {strides = array<i32>} : memref<1x8x128xf32, #tpu.memory_space<vmem>>, vector<1x8x128xf32>,
    } else {
    }
    return
  }
  func.func @transform_0(%arg0: i32, %arg1: i32) -> (i32, i32) {
    %c0_i32 = arith.constant 0 : i32
    %c0_i32_0 = arith.constant 0 : i32
    %c0_i32_1 = arith.constant 0 : i32
    return %c0_i32, %c0_i32_0 : i32, i32
  }
  func.func @transform_1(%arg0: i32, %arg1: i32) -> (i32, i32) {
    %c1_i32 = arith.constant 1 : i32
    %0 = arith.muli %arg0, %c1_i32 : i32
    %1 = arith.addi %0, %arg1 : i32
    %c0_i32 = arith.constant 0 : i32
    %c0_i32_0 = arith.constant 0 : i32
    return %1, %c0_i32 : i32, i32
  }
  func.func @transform_2(%arg0: i32, %arg1: i32) -> (i32, i32) {
    %c1_i32 = arith.constant 1 : i32
    %0 = arith.muli %arg0, %c1_i32 : i32
    %1 = arith.addi %0, %arg1 : i32
    %c0_i32 = arith.constant 0 : i32
    %c0_i32_0 = arith.constant 0 : i32
    return %1, %c0_i32 : i32, i32
  }
  func.func @transform_3(%arg0: i32, %arg1: i32) -> (i32, i32, i32) {
    %c0_i32 = arith.constant 0 : i32
    %c0_i32_0 = arith.constant 0 : i32
    %c0_i32_1 = arith.constant 0 : i32
    return %arg0, %c0_i32, %c0_i32_0 : i32, i32, i32
  }
}

</mosaic_0001>

<llo_original>
// kernel: tpu_custom_call.1
$region0: #{tpu_custom_call.1}
  #allocation0 [shape = 'u32[]', space=smem, size = 0x4, offset = 0x4, fixed_abs, tag = 'smem constant byte address 0x4 - core index']
  #allocation1 [shape = 'u32[144,128]{1,0:T(1,128)}', space=vmem, size = 0x12000, scoped, tag = 'internal scratch']
  #allocation2 [shape = 'f32[8,128]{1,0:T(8,128)}', space=vmem, size = 0x1000, scoped, tag = 'scratch operand']
  #allocation3 [shape = 'f32[1,128]{1,0:T(1,128)}', space=vmem, size = 0x200, scoped, tag = 'scratch operand']
  #allocation4 [shape = 'f32[1,1]{1,0:T(1,128)S(6)}', space=smem, size = 0x200, scoped, tag = 'scoped memory for tpu_custom_call.1']
  %s0 = inlined_call_operand.<no memory space> [shape: f32[1,1], index: 0, kind: input, shape index: {}]
  %s1 = inlined_call_operand.hbm [shape: f32[64,128], index: 1, kind: input, shape index: {}]
  %s2 = inlined_call_operand.hbm [shape: f32[64,128], index: 2, kind: input, shape index: {}]
  %s3 = inlined_call_operand.hbm [shape: f32[2,8,128], index: 3, kind: output, shape index: {}]
  %s4 = sld [smem:[#allocation0]]
  $region61: #{tpu_custom_call.1} parent=0
    _
  %s6 = ssub.s32 1, %s4
  %s7 = scalar_select 0, %s6, %s4
  %8 = sst [smem:[#allocation4]] %s0
  $region1: #{tpu_custom_call.1} parent=0
    #allocation5 [shape = 'u8[32768]{0}', space=vmem, size = 0x8000, scoped, tag = 'input window, operand 1']
    #allocation6 [shape = 's32[2]{0}', space=sflag, size = 0x8, scoped, tag = 'scoped memory for tpu_custom_call.1']
    #allocation7 [shape = 's32[2]{0}', space=sflag, size = 0x8, scoped, tag = 'scoped memory for tpu_custom_call.1']
    #allocation8 [shape = 'u8[32768]{0}', space=vmem, size = 0x8000, scoped, tag = 'input window, operand 2']
    #allocation9 [shape = 's32[2]{0}', space=sflag, size = 0x8, scoped, tag = 'scoped memory for tpu_custom_call.1']
    #allocation10 [shape = 'u8[8192]{0}', space=vmem, size = 0x2000, scoped, tag = 'output window, operand 0']
    %9 = vsyncpa [#allocation6], 0
    %s10 = scalar_lea.sflag [#allocation6], 1
    %11 = vsyncpa %s10, 0
    %12 = vsyncpa [#allocation9], 0
    %s13 = scalar_lea.sflag [#allocation9], 1
    %14 = vsyncpa %s13, 0
    %15 = vsyncpa [#allocation7], 0
    %s16 = scalar_lea.sflag [#allocation7], 1
    %17 = vsyncpa %s16, 0
    loop: start=0, step=1, limit=4
    $region2: #{tpu_custom_call.1} parent=1 // loop_pre_header
      _
    $region3: #{tpu_custom_call.1} parent=1 // loop_header
      %s19 = sphi 0, %s23
      %p20 = scmp.ge.s32.totalorder %s19, 4
      %s26 = sphi 0, %s38
      %s27 = sphi 0, %s34
      %s28 = sphi 0, %s26
      %s29 = sphi 0, %s27
      %s30 = sphi 0, %s28
      %s31 = sphi 0, %s29
      %s39 = sphi 0, %s39
      %s41 = sphi 0, %s39
      %s42 = sphi 0, %s41
      %s56 = sphi 0, %s42
      %s64 = sphi 0, %s66
      %s67 = sphi 0, %s64
      %s68 = sphi 0, %s67
      %s84 = sphi 0, %s68
      %s92 = sphi 0, %s94
      %s95 = sphi 0, %s92
      %s96 = sphi 0, %s95
      %s112 = sphi 0, %s96
      %s118 = sphi 0, %s120
      %s121 = sphi 0, %s118
      %s122 = sphi 0, %s121
      %s138 = sphi 0, %s122
    $region4: #{tpu_custom_call.1} parent=1 // loop_header_branch
      %22 = sbr.rel (%p20) target = $region8
    $region5: #{tpu_custom_call.1} parent=1 // loop_body
      %s24 = ssub.s32 %s19, 1
      %s25 = ssub.s32 %s19, 2
      %s32 = sadd.s32 1, %s27
      %p33 = scmp.ge.s32.totalorder %s32, 1
      %s34 = scalar_select %p33, 0, %s32
      %s35 = sadd.s32 1, %s26
      %s36 = scalar_select %p33, %s35, %s26
      %p37 = scmp.ge.s32.totalorder %s36, 2
      %s38 = scalar_select %p37, 0, %s36
      %s40 = sadd.s32 %s39, 1
      %p43 = scmp.eq.s32.totalorder %s19, 1
      %p44 = scmp.ne.s32.totalorder %s39, %s41
      %p45 = scmp.eq.s32.totalorder %s19, 0
      %p46 = por %p44, %p45
      %p47 = scmp.ne.s32.totalorder %s39, %s41
      %p48 = scmp.eq.s32.totalorder %s24, 1
      %p49 = por %p47, %p48
      %p50 = scmp.ne.s32.totalorder %s41, %s42
      %p51 = scmp.eq.s32.totalorder %s24, 0
      %p52 = por %p50, %p51
      %p53 = scmp.ne.s32.totalorder %s41, %s42
      %p54 = scmp.eq.s32.totalorder %s25, 1
      %p55 = por %p53, %p54
      %p57 = scmp.ne.s32.totalorder %s42, %s56
      %p58 = scmp.eq.s32.totalorder %s25, 0
      %p59 = por %p57, %p58
      %s60 = sadd.s32 %s26, %s27
      %s61 = sadd.s32 %s38, %s34
      %s62 = ssub.s32 %s60, %s61
      %p63 = scmp.eq.s32.totalorder %s62, 0
      %s65 = sadd.s32 %s64, 1
      %s66 = scalar_select %p63, %s64, %s65
      %p69 = pneg %p63
      %p70 = scmp.eq.s32.totalorder %s19, 1
      %p71 = por %p69, %p70
      %p72 = scmp.ne.s32.totalorder %s64, %s67
      %p73 = scmp.eq.s32.totalorder %s19, 0
      %p74 = por %p72, %p73
      %p75 = scmp.ne.s32.totalorder %s64, %s67
      %p76 = scmp.eq.s32.totalorder %s24, 1
      %p77 = por %p75, %p76
      %p78 = scmp.ne.s32.totalorder %s67, %s68
      %p79 = scmp.eq.s32.totalorder %s24, 0
      %p80 = por %p78, %p79
      %p81 = scmp.ne.s32.totalorder %s67, %s68
      %p82 = scmp.eq.s32.totalorder %s25, 1
      %p83 = por %p81, %p82
      %p85 = scmp.ne.s32.totalorder %s68, %s84
      %p86 = scmp.eq.s32.totalorder %s25, 0
      %p87 = por %p85, %p86
      %s88 = sadd.s32 %s26, %s27
      %s89 = sadd.s32 %s38, %s34
      %s90 = ssub.s32 %s88, %s89
      %p91 = scmp.eq.s32.totalorder %s90, 0
      %s93 = sadd.s32 %s92, 1
      %s94 = scalar_select %p91, %s92, %s93
      %p97 = pneg %p91
      %p98 = scmp.eq.s32.totalorder %s19, 1
      %p99 = por %p97, %p98
      %p100 = scmp.ne.s32.totalorder %s92, %s95
      %p101 = scmp.eq.s32.totalorder %s19, 0
      %p102 = por %p100, %p101
      %p103 = scmp.ne.s32.totalorder %s92, %s95
      %p104 = scmp.eq.s32.totalorder %s24, 1
      %p105 = por %p103, %p104
      %p106 = scmp.ne.s32.totalorder %s95, %s96
      %p107 = scmp.eq.s32.totalorder %s24, 0
      %p108 = por %p106, %p107
      %p109 = scmp.ne.s32.totalorder %s95, %s96
      %p110 = scmp.eq.s32.totalorder %s25, 1
      %p111 = por %p109, %p110
      %p113 = scmp.ne.s32.totalorder %s96, %s112
      %p114 = scmp.eq.s32.totalorder %s25, 0
      %p115 = por %p113, %p114
      %s116 = ssub.s32 %s26, %s38
      %p117 = scmp.eq.s32.totalorder %s116, 0
      %s119 = sadd.s32 %s118, 1
      %s120 = scalar_select %p117, %s118, %s119
      %p123 = pneg %p117
      %p124 = scmp.eq.s32.totalorder %s19, 1
      %p125 = por %p123, %p124
      %p126 = scmp.ne.s32.totalorder %s118, %s121
      %p127 = scmp.eq.s32.totalorder %s19, 0
      %p128 = por %p126, %p127
      %p129 = scmp.ne.s32.totalorder %s118, %s121
      %p130 = scmp.eq.s32.totalorder %s24, 1
      %p131 = por %p129, %p130
      %p132 = scmp.ne.s32.totalorder %s121, %s122
      %p133 = scmp.eq.s32.totalorder %s24, 0
      %p134 = por %p132, %p133
      %p135 = scmp.ne.s32.totalorder %s121, %s122
      %p136 = scmp.eq.s32.totalorder %s25, 1
      %p137 = por %p135, %p136
      %p139 = scmp.ne.s32.totalorder %s122, %s138
      %p140 = scmp.eq.s32.totalorder %s25, 0
      %p141 = por %p139, %p140
      %p142 = scmp.le.s32.totalorder 1, %s19
      %p143 = scmp.lt.s32.totalorder %s19, 3
      %p144 = pnand %p142, %p143
      %p145 = pneg %p144
      // Predicated region
      $region9: #{tpu_custom_call.1} parent=5 // pred_check
        _
      $region10: #{tpu_custom_call.1} parent=5 // pred_check_branch
        %147 = sbr.rel (%p144) target = $region12
      $region11: #{tpu_custom_call.1} parent=5 // pred_region
        %s148 = ssub.s32 %s19, 1
        // Predicated region
        $region13: #{tpu_custom_call.1} parent=11 // pred_check
          %p149 = pneg %p52
        $region14: #{tpu_custom_call.1} parent=11 // pred_check_branch
          %151 = sbr.rel (%p149) target = $region16
        $region15: #{tpu_custom_call.1} parent=11 // pred_region
          _
        $region16: #{tpu_custom_call.1} parent=11 // pred_fallthru
          _
      $region12: #{tpu_custom_call.1} parent=5 // pred_fallthru
        _
      %p152 = scmp.lt.s32.totalorder %s19, 2
      // Predicated region
      $region17: #{tpu_custom_call.1} parent=5 // pred_check
        %p153 = pneg %p152
      $region18: #{tpu_custom_call.1} parent=5 // pred_check_branch
        %155 = sbr.rel (%p153) target = $region20
      $region19: #{tpu_custom_call.1} parent=5 // pred_region
        // Predicated region
        $region21: #{tpu_custom_call.1} parent=19 // pred_check
          %p156 = pneg %p74
        $region22: #{tpu_custom_call.1} parent=19 // pred_check_branch
          %158 = sbr.rel (%p156) target = $region24
        $region23: #{tpu_custom_call.1} parent=19 // pred_region
          %s159 = sand.u32 %s64, 1
          %s160 = scalar_lea.sflag [#allocation6], %s159
          %s161 = sand.u32 %s64, 1
          %s162 = smul.addr %s161, 32
          %s163 = scalar_lea.vmem [#allocation5], %s162
          %s164 = sadd.s32 %s26, %s27
          %s165 = smul.u32 4, %s164
          %s167 = ssub.s32 512, 512
          %168 = vsyncadd %s160, %s167
          %s169 = smul.addr %s165, 128
          %s170 = scalar_lea.hbm %s1, %s169
          %s171 = sshll.u32 %s163, 4
          %s172 = int_to_ptr.vmem [resolvable:$true] %s171
          %177 = dma.hbm_to_vmem [thread:$0]  %s170, 512, %s172, %s160, 128, 128, 8
        $region24: #{tpu_custom_call.1} parent=19 // pred_fallthru
          _
        // Predicated region
        $region25: #{tpu_custom_call.1} parent=19 // pred_check
          %p178 = pneg %p102
        $region26: #{tpu_custom_call.1} parent=19 // pred_check_branch
          %180 = sbr.rel (%p178) target = $region28
        $region27: #{tpu_custom_call.1} parent=19 // pred_region
          %s181 = sand.u32 %s92, 1
          %s182 = scalar_lea.sflag [#allocation9], %s181
          %s183 = sand.u32 %s92, 1
          %s184 = smul.addr %s183, 32
          %s185 = scalar_lea.vmem [#allocation8], %s184
          %s186 = sadd.s32 %s26, %s27
          %s187 = smul.u32 4, %s186
          %s189 = ssub.s32 512, 512
          %190 = vsyncadd %s182, %s189
          %s191 = smul.addr %s187, 128
          %s192 = scalar_lea.hbm %s2, %s191
          %s193 = sshll.u32 %s185, 4
          %s194 = int_to_ptr.vmem [resolvable:$true] %s193
          %199 = dma.hbm_to_vmem [thread:$0]  %s192, 512, %s194, %s182, 128, 128, 8
        $region28: #{tpu_custom_call.1} parent=19 // pred_fallthru
          _
      $region20: #{tpu_custom_call.1} parent=5 // pred_fallthru
        _
      %p200 = scmp.le.s32.totalorder 1, %s19
      %p201 = scmp.lt.s32.totalorder %s19, 3
      %p202 = pnand %p200, %p201
      %p203 = pneg %p202
      // Predicated region
      $region29: #{tpu_custom_call.1} parent=5 // pred_check
        _
      $region30: #{tpu_custom_call.1} parent=5 // pred_check_branch
        %205 = sbr.rel (%p202) target = $region32
      $region31: #{tpu_custom_call.1} parent=5 // pred_region
        %s206 = ssub.s32 %s19, 1
        %s207 = sand.u32 %s67, 1
        %s208 = scalar_lea.sflag [#allocation6], %s207
        %s209 = sand.u32 %s67, 1
        %s210 = smul.addr %s209, 32
        %s211 = scalar_lea.vmem [#allocation5], %s210
        // Predicated region
        $region33: #{tpu_custom_call.1} parent=31 // pred_check
          %p212 = pneg %p80
        $region34: #{tpu_custom_call.1} parent=31 // pred_check_branch
          %214 = sbr.rel (%p212) target = $region36
        $region35: #{tpu_custom_call.1} parent=31 // pred_region
          %215 = dma.done %s208, 512
        $region36: #{tpu_custom_call.1} parent=31 // pred_fallthru
          _
        %s216 = sand.u32 %s95, 1
        %s217 = scalar_lea.sflag [#allocation9], %s216
        %s218 = sand.u32 %s95, 1
        %s219 = smul.addr %s218, 32
        %s220 = scalar_lea.vmem [#allocation8], %s219
        // Predicated region
        $region37: #{tpu_custom_call.1} parent=31 // pred_check
          %p221 = pneg %p108
        $region38: #{tpu_custom_call.1} parent=31 // pred_check_branch
          %223 = sbr.rel (%p221) target = $region40
        $region39: #{tpu_custom_call.1} parent=31 // pred_region
          %224 = dma.done %s217, 512
        $region40: #{tpu_custom_call.1} parent=31 // pred_fallthru
          _
        %p225 = pneg %p52
        %p226 = pneg %p49
        %s227 = sand.u32 %s67, 1
        %s228 = scalar_lea.sflag [#allocation6], %s227
        %s229 = sand.u32 %s67, 1
        %s230 = smul.addr %s229, 32
        %s231 = scalar_lea.vmem [#allocation5], %s230
        %p232 = pneg %p80
        %p233 = pneg %p77
        %s234 = sand.u32 %s95, 1
        %s235 = scalar_lea.sflag [#allocation9], %s234
        %s236 = sand.u32 %s95, 1
        %s237 = smul.addr %s236, 32
        %s238 = scalar_lea.vmem [#allocation8], %s237
        %p239 = pneg %p108
        %p240 = pneg %p105
        %p241 = pneg %p134
        %p242 = pneg %p131
        %s243 = sand.u32 %s121, 1
        %s244 = scalar_lea.sflag [#allocation7], %s243
        %s245 = sand.u32 %s121, 1
        %s246 = smul.addr %s245, 8
        %s247 = scalar_lea.vmem [#allocation10], %s246
        %s248 = sadd.s32 %s28, %s29
        %s249 = smul.u32 4, %s248
        %s250 = sadd.s32 %s28, %s29
        %s251 = smul.u32 4, %s250
        %v252 = vld [vmem:[%s211] sm:$0xff]
        %v253 = vld [vmem:[%s211 + $0x8] sm:$0xff]
        %v254 = vld [vmem:[%s211 + $0x10] sm:$0xff]
        %v255 = vld [vmem:[%s211 + $0x18] sm:$0xff]
        %v256 = vld [vmem:[%s220] sm:$0xff]
        %v257 = vld [vmem:[%s220 + $0x8] sm:$0xff]
        %v258 = vld [vmem:[%s220 + $0x10] sm:$0xff]
        %v259 = vld [vmem:[%s220 + $0x18] sm:$0xff]
        %p260 = scmp.eq.s32.totalorder %s29, 0
        // Predicated region
        $region41: #{tpu_custom_call.1} parent=31 // pred_check
          %p261 = pneg %p260
        $region42: #{tpu_custom_call.1} parent=31 // pred_check_branch
          %263 = sbr.rel (%p261) target = $region44
        $region43: #{tpu_custom_call.1} parent=31 // pred_region
          %264 = vst [vmem:[#allocation2] sm:$0xff] 0.0
          %265 = vst [vmem:[#allocation3] sm:$0x1] %v252
        $region44: #{tpu_custom_call.1} parent=31 // pred_fallthru
          _
        %v266 = vsub.f32 %v252, %v256
        %v267 = vsub.f32 %v253, %v257
        %v268 = vsub.f32 %v254, %v258
        %v269 = vsub.f32 %v255, %v259
        %v270 = vmul.f32 %v266, %v266
        %v271 = vmul.f32 %v267, %v267
        %v272 = vmul.f32 %v268, %v268
        %v273 = vmul.f32 %v269, %v269
        %vm274 = vcmp.ge.f32.partialorder %v256, 20.0
        %vm275 = vcmp.ge.f32.partialorder %v257, 20.0
        %vm276 = vcmp.ge.f32.partialorder %v258, 20.0
        %vm277 = vcmp.ge.f32.partialorder %v259, 20.0
        %vm278 = vcmp.lt.f32.partialorder %v256, 18.0
        %vm279 = vcmp.lt.f32.partialorder %v257, 18.0
        %vm280 = vcmp.lt.f32.partialorder %v258, 18.0
        %vm281 = vcmp.lt.f32.partialorder %v259, 18.0
        %v282 = vsel %vm278, 0.0014648438, 0.00036621094
        %v283 = vsel %vm279, 0.0014648438, 0.00036621094
        %v284 = vsel %vm280, 0.0014648438, 0.00036621094
        %v285 = vsel %vm281, 0.0014648438, 0.00036621094
        %v286 = vsel %vm274, 0.0014648438, %v282
        %v287 = vsel %vm275, 0.0014648438, %v283
        %v288 = vsel %vm276, 0.0014648438, %v284
        %v289 = vsel %vm277, 0.0014648438, %v285
        %s290 = sld [smem:[#allocation4]]
        %v291 = vrot.slane %v252, 7
        %v292 = vrot.slane %v253, 7
        %v293 = vrot.slane %v254, 7
        %v294 = vrot.slane %v255, 7
        %v295 = vlaneseq
        %v296 = vshrl.u32 %v295, 7
        %vm297 = vcmp.lt.s32.totalorder %v296, 1
        %v298 = vsel %vm297, %v293, %v294
        %v299 = vsel %vm297, %v292, %v293
        %v300 = vsel %vm297, %v291, %v292
        %v301 = vsel %vm297, %v294, %v291
        %v302 = vmul.f32 %v286, %v270
        %v303 = vmul.f32 %v287, %v271
        %v304 = vmul.f32 %v288, %v272
        %v305 = vmul.f32 %v289, %v273
        %v306 = vstv %s290
        %v307 = vsub.f32 %v252, %v306
        %v308 = vsub.f32 %v253, %v306
        %v309 = vsub.f32 %v254, %v306
        %v310 = vsub.f32 %v255, %v306
        %v311 = vand.u32 2147483647, %v307
        %v312 = vand.u32 2147483647, %v308
        %v313 = vand.u32 2147483647, %v309
        %v314 = vand.u32 2147483647, %v310
        %v315 = vmul.f32 %v311, 4.8828124e-06
        %v316 = vmul.f32 %v312, 4.8828124e-06
        %v317 = vmul.f32 %v313, 4.8828124e-06
        %v318 = vmul.f32 %v314, 4.8828124e-06
        %v319 = vadd.f32 %v302, %v315
        %v320 = vadd.f32 %v303, %v316
        %v321 = vadd.f32 %v304, %v317
        %v322 = vadd.f32 %v305, %v318
        %v323 = vsub.f32 %v301, %v252
        %v324 = vsub.f32 %v300, %v253
        %v325 = vsub.f32 %v299, %v254
        %v326 = vsub.f32 %v298, %v255
        %v327 = vand.u32 2147483647, %v323
        %v328 = vand.u32 2147483647, %v324
        %v329 = vand.u32 2147483647, %v325
        %v330 = vand.u32 2147483647, %v326
        %v331 = vmul.f32 %v327, 0.01
        %v332 = vmul.f32 %v328, 0.01
        %v333 = vmul.f32 %v329, 0.01
        %v334 = vmul.f32 %v330, 0.01
        %v335 = vadd.f32 %v319, %v331
        %v336 = vadd.f32 %v320, %v332
        %v337 = vadd.f32 %v321, %v333
        %v338 = vadd.f32 %v322, %v334
        %v339 = vadd.f32 %v335, %v336
        %v340 = vadd.f32 %v339, %v337
        %v341 = vadd.f32 %v340, %v338
        %v342 = vld [vmem:[#allocation3] sm:$0x1]
        %v343 = vsub.f32 %v342, %v252
        %v344 = vand.u32 2147483647, %v343
        %v346 = vrot.slane %v252, 1
        %v348 = vsub.f32 %v255, %v346
        %v349 = vand.u32 2147483647, %v348
        %v351 = vcombine.high %v349, %v349
        %v353 = vunpack.c.l.s4 1966171168
        %v354 = vunpack.c.0.s8 %v353
        %v355 = vlaneseq
        %v356 = vshrl.u32 %v355, 7
        %v357 = vsub.s32 %v354, %v356
        %v358 = vrot.slane %v351, %v357
        %v359 = vcombine.high %v358, %v358
        %v361 = vunpack.c.l.s4 1966171168
        %v362 = vunpack.c.0.s8 %v361
        %v363 = vlaneseq
        %v364 = vshrl.u32 %v363, 7
        %v365 = vsub.s32 %v362, %v364
        %v366 = vrot.slane %v359, %v365
        %v367 = vcombine.high %v366, %v366
        %v369 = vsub.f32 %v344, %v367
        %v370 = vmul.f32 %v369, 0.01
        %vm371 = vcmp.eq.s32.totalorder %v296, 0
        %v372 = vsel %vm371, 1, 0
        %vm373 = vcmp.eq.s32.totalorder %v372, 1
        %v375 = vlaneseq
        %v376 = vshrl.u32 %v375, 7
        %v377 = vsub.s32 0, %v376
        %v378 = vrot.slane %v370, %v377
        %v380 = vsel %vm373, %v378, 0.0
        %v381 = vadd.f32 %v341, %v380
        %v382 = vld [vmem:[#allocation2] sm:$0xff]
        %v383 = vadd.f32 %v382, %v381
        %384 = vst [vmem:[#allocation2] sm:$0xff] %v383
        %385 = vst [vmem:[#allocation3 - $0x7] sm:$0x80] %v255
        // Predicated region
        $region45: #{tpu_custom_call.1} parent=31 // pred_check
          %p386 = pneg %p260
        $region46: #{tpu_custom_call.1} parent=31 // pred_check_branch
          %388 = sbr.rel (%p386) target = $region48
        $region47: #{tpu_custom_call.1} parent=31 // pred_region
          %v389 = vld [vmem:[#allocation2] sm:$0xff]
          %390 = vadd.xlane.f32.xlu0 %v389
          %v391 = vpop.xlane.xlu0 %390
          %v392 = vrot.slane %v391, 4
          %v393 = vadd.f32 %v391, %v392
          %v394 = vrot.slane %v393, 2
          %v395 = vadd.f32 %v393, %v394
          %v396 = vrot.slane %v395, 1
          %v397 = vadd.f32 %v395, %v396
          %s398 = vtos %v397
          %v399 = vstv %s398
          %400 = vst [vmem:[%s247] sm:$0xff] %v399
        $region48: #{tpu_custom_call.1} parent=31 // pred_fallthru
          _
        %s401 = sand.u32 %s121, 1
        %s402 = scalar_lea.sflag [#allocation7], %s401
        %s403 = sand.u32 %s121, 1
        %s404 = smul.addr %s403, 8
        %s405 = scalar_lea.vmem [#allocation10], %s404
        // Predicated region
        $region49: #{tpu_custom_call.1} parent=31 // pred_check
          %p406 = pneg %p131
        $region50: #{tpu_custom_call.1} parent=31 // pred_check_branch
          %408 = sbr.rel (%p406) target = $region52
        $region51: #{tpu_custom_call.1} parent=31 // pred_region
          %s410 = ssub.s32 128, 128
          %411 = vsyncadd %s402, %s410
          %s412 = smul.addr %s28, 128
          %s413 = scalar_lea.hbm %s3, %s412
          %s415 = sshll.u32 %s405, 4
          %s416 = int_to_ptr.vmem [resolvable:$true] %s415
          %418 = dma.vmem_to_hbm [thread:$0]  %s416, 128, %s413, %s402
        $region52: #{tpu_custom_call.1} parent=31 // pred_fallthru
          _
      $region32: #{tpu_custom_call.1} parent=5 // pred_fallthru
        _
      %p419 = scmp.le.s32.totalorder 2, %s19
      // Predicated region
      $region53: #{tpu_custom_call.1} parent=5 // pred_check
        %p420 = pneg %p419
      $region54: #{tpu_custom_call.1} parent=5 // pred_check_branch
        %422 = sbr.rel (%p420) target = $region56
      $region55: #{tpu_custom_call.1} parent=5 // pred_region
        %s423 = ssub.s32 %s19, 2
        // Predicated region
        $region57: #{tpu_custom_call.1} parent=55 // pred_check
          %p424 = pneg %p137
        $region58: #{tpu_custom_call.1} parent=55 // pred_check_branch
          %426 = sbr.rel (%p424) target = $region60
        $region59: #{tpu_custom_call.1} parent=55 // pred_region
          %s427 = sand.u32 %s122, 1
          %s428 = scalar_lea.sflag [#allocation7], %s427
          %s429 = sand.u32 %s122, 1
          %s430 = smul.addr %s429, 8
          %s431 = scalar_lea.vmem [#allocation10], %s430
          %432 = dma.done %s428, 128
        $region60: #{tpu_custom_call.1} parent=55 // pred_fallthru
          _
      $region56: #{tpu_custom_call.1} parent=5 // pred_fallthru
        _
    $region6: #{tpu_custom_call.1} parent=1 // loop_footer
      %s23 = sadd.s32 1, %s19
    $region7: #{tpu_custom_call.1} parent=1 // loop_footer_branch
      %18 = sbr.rel target = $region3
    $region8: #{tpu_custom_call.1} parent=1 // loop_exit
      _
    %433 = vsyncpa [#allocation6], 1
    %s434 = scalar_lea.sflag [#allocation6], 1
    %435 = vsyncpa %s434, 1
    %436 = vsyncpa [#allocation9], 1
    %s437 = scalar_lea.sflag [#allocation9], 1
    %438 = vsyncpa %s437, 1
    %439 = vsyncpa [#allocation7], 1
    %s440 = scalar_lea.sflag [#allocation7], 1
    %441 = vsyncpa %s440, 1

</llo_original>
